<compile_context>
chip_gen: v6e
topology: v6e:2x2x1
jax: 0.10.0
libtpu: 0.0.40
codegen_flags: <defaults>
</compile_context>

<pallas_src>
import functools

import jax
import jax.numpy as jnp
from jax import lax
from jax.experimental import pallas as pl
from jax.experimental.pallas import tpu as pltpu

NEG = -1.0e30  # finite "minus infinity" used to mask padded vocab columns


def _round_up(x, m):
    return ((x + m - 1) // m) * m


# ----------------------------------------------------------------------------
# Fused Pallas kernel.
#   x_ref   : (1, tile_t, D)    bf16   encoder states (one batch row / time tile)
#   w_ref   : (D, tile_v)       bf16   projection weight vocab tile
#   b_ref   : (1, tile_v)       f32    bias tile; padded vocab cols hold -1e30
#   wext_ref: (1, D, S_pad)     bf16   weight columns gathered at extended labels
#   bext_ref: (1, 1, S_pad)     f32    bias gathered at extended labels
#   o_ref   : (1, tile_t, S_pad) f32   log p(ext[s]) per frame
#   m_sc/l_sc: (tile_t, 1)      f32    running max / sum-exp (online softmax)
# ----------------------------------------------------------------------------
def _ctc_fused_kernel(x_ref, w_ref, b_ref, wext_ref, bext_ref, o_ref, m_sc, l_sc):
    v = pl.program_id(2)

    @pl.when(v == 0)
    def _():
        m_sc[...] = jnp.full_like(m_sc, NEG)
        l_sc[...] = jnp.zeros_like(l_sc)

    x = x_ref[0]                                                    # (tile_t, D) bf16
    logits = jnp.dot(x, w_ref[...], preferred_element_type=jnp.float32)
    logits = logits + b_ref[...]                                    # padded cols -> ~-1e30

    # Online logsumexp over the vocab axis (never materialize full log-probs).
    m_blk = jnp.max(logits, axis=-1, keepdims=True)                 # (tile_t, 1)
    m_new = jnp.maximum(m_sc[...], m_blk)
    l_sc[...] = (jnp.exp(m_sc[...] - m_new) * l_sc[...]
                 + jnp.sum(jnp.exp(logits - m_new), axis=-1, keepdims=True))
    m_sc[...] = m_new

    @pl.when(v == pl.num_programs(2) - 1)
    def _():
        # Gathered logits at the extended-label columns: small bf16 MXU matmul
        # against the pre-gathered (D, S_pad) weight slice.
        g = jnp.dot(x, wext_ref[0], preferred_element_type=jnp.float32)
        g = g + bext_ref[0]
        lse = m_sc[...] + jnp.log(l_sc[...])
        o_ref[0] = g - lse


# ----------------------------------------------------------------------------
# VMEM budgeting / tile selection (generation-aware).
# ----------------------------------------------------------------------------
def _vmem_budget_bytes():
    cap = 64 * 1024 * 1024  # conservative fallback = v7x physical VMEM
    try:
        cap = int(pltpu.get_tpu_info().vmem_capacity_bytes)
    except Exception:
        pass
    return int(cap * 0.8)   # ~20% headroom


def _estimate_vmem(tile_t, tile_v, D, S_pad):
    # Count BlockSpec inputs/outputs double-buffered (Pallas default pipelining).
    return (
        2 * tile_t * D * 2          # x blocks (bf16)
        + 2 * D * tile_v * 2        # W vocab tiles (bf16)
        + 2 * tile_v * 4            # bias tiles (f32)
        + 2 * D * S_pad * 2         # gathered weight slice (bf16)
        + 2 * S_pad * 4             # gathered bias (f32)
        + 2 * tile_t * S_pad * 4    # output blocks (f32)
        + 3 * tile_t * tile_v * 4   # in-kernel f32 logits / exp temporaries
        + 2 * tile_t * S_pad * 4    # gathered-logits temporary
        + 4 * tile_t * 4            # running max / sum-exp scratch
    )


def _choose_tiles(T, D, Vp, S_pad, budget):
    t_cap = _round_up(max(T, 8), 8)
    tt_big = [t for t in (512, 256, 128) if t <= t_cap] or [t_cap]
    tt_small = [t for t in (64, 32, 16, 8) if t <= t_cap]
    tv_cands = [Vp] + [v for v in (8192, 4096, 2048, 1024, 512, 256)
                       if v < Vp and Vp % v == 0]
    # Pass 1: keep the time tile large; shrink the vocab tile (online softmax) first.
    for tv in tv_cands:
        for tt in tt_big:
            if _estimate_vmem(tt, tv, D, S_pad) <= budget:
                return tt, tv
    # Pass 2: shrink the time tile as a last resort.
    for tv in tv_cands:
        for tt in tt_small:
            if _estimate_vmem(tt, tv, D, S_pad) <= budget:
                return tt, tv
    return (tt_small[-1] if tt_small else tt_big[-1]), tv_cands[-1]


# ----------------------------------------------------------------------------
# Pallas wrapper: projection + log_softmax + label gather.
# ----------------------------------------------------------------------------
def ctc_project_gather(hs_pad, w_p, b_p, w_ext, b_ext):
    """hs_pad: (B, T, D) f32; w_p: (D, Vp) bf16; b_p: (1, Vp) f32;
    w_ext: (B, D, S_pad) bf16; b_ext: (B, 1, S_pad) f32.
    Returns (B, T, S_pad) f32 log-probs at the extended CTC labels."""
    B, T, D = hs_pad.shape
    Vp = w_p.shape[1]
    S_pad = w_ext.shape[2]

    budget = _vmem_budget_bytes()
    tile_t, tile_v = _choose_tiles(T, D, Vp, S_pad, budget)
    T_pad = _round_up(T, tile_t)

    x = hs_pad.astype(jnp.bfloat16)
    if T_pad != T:
        x = jnp.pad(x, ((0, 0), (0, T_pad - T), (0, 0)))

    grid = (B, T_pad // tile_t, Vp // tile_v)

    est = _estimate_vmem(tile_t, tile_v, D, S_pad)
    vmem_limit = int(min(budget, max(32 * 1024 * 1024, int(est * 1.5))))

    cost = pl.CostEstimate(
        flops=2 * B * T_pad * D * (Vp + S_pad),
        transcendentals=B * T_pad * Vp,
        bytes_accessed=(B * T_pad * D * 2 + D * Vp * 2 + Vp * 4
                        + B * D * S_pad * 2 + B * S_pad * 4
                        + B * T_pad * S_pad * 4),
    )

    out = pl.pallas_call(
        _ctc_fused_kernel,
        out_shape=jax.ShapeDtypeStruct((B, T_pad, S_pad), jnp.float32),
        grid_spec=pltpu.PrefetchScalarGridSpec(
            num_scalar_prefetch=0,
            grid=grid,
            in_specs=[
                pl.BlockSpec((1, tile_t, D), lambda b, t, v: (b, t, 0)),
                pl.BlockSpec((D, tile_v), lambda b, t, v: (0, v)),
                pl.BlockSpec((1, tile_v), lambda b, t, v: (0, v)),
                pl.BlockSpec((1, D, S_pad), lambda b, t, v: (b, 0, 0)),
                pl.BlockSpec((1, 1, S_pad), lambda b, t, v: (b, 0, 0)),
            ],
            out_specs=pl.BlockSpec((1, tile_t, S_pad), lambda b, t, v: (b, t, 0)),
            scratch_shapes=[
                pltpu.VMEM((tile_t, 1), jnp.float32),   # running max
                pltpu.VMEM((tile_t, 1), jnp.float32),   # running sum-exp
            ],
        ),
        compiler_params=pltpu.CompilerParams(
            dimension_semantics=("parallel", "parallel", "arbitrary"),
            vmem_limit_bytes=vmem_limit,
        ),
        cost_estimate=cost,
    )(x, w_p, b_p, w_ext, b_ext)
    return out[:, :T, :]


# ----------------------------------------------------------------------------
# CTC loss (alpha recursion) on already-gathered extended log-probs.
# Matches torch.nn.CTCLoss(blank=0, reduction='sum', zero_infinity=True).
# ----------------------------------------------------------------------------
def _safe_lse3(a, b, c):
    m = jnp.maximum(jnp.maximum(a, b), c)
    m_safe = jnp.where(jnp.isneginf(m), 0.0, m)
    s = jnp.exp(a - m_safe) + jnp.exp(b - m_safe) + jnp.exp(c - m_safe)
    return jnp.where(jnp.isneginf(m), -jnp.inf, m_safe + jnp.log(s))


def ctc_loss_sum_gathered(lp, ext, input_lengths, target_lengths, blank=0):
    """lp: (T, B, S_pad) log-probs gathered at extended labels; ext: (B, S_pad)."""
    T, B, S = lp.shape
    neg_inf = jnp.float32(-jnp.inf)
    tl = target_lengths.astype(jnp.int32)

    alpha0 = jnp.full((B, S), neg_inf, dtype=jnp.float32)
    alpha0 = alpha0.at[:, 0].set(lp[0, :, 0])
    alpha0 = alpha0.at[:, 1].set(jnp.where(tl > 0, lp[0, :, 1], neg_inf))

    # Transition mask for the skip (s-2) connection.
    ext_sm2 = jnp.concatenate(
        [jnp.full((B, 2), -1, dtype=jnp.int32), ext[:, :-2]], axis=1)
    allow2 = (ext != blank) & (ext != ext_sm2)                      # (B, S)

    def step(alpha, xs):
        t, lp_t = xs                                                # scalar, (B, S)
        col = jnp.full((B, 1), neg_inf, dtype=jnp.float32)
        a1 = jnp.concatenate([col, alpha[:, :-1]], axis=1)
        a2 = jnp.concatenate([col, col, alpha[:, :-2]], axis=1)
        a2 = jnp.where(allow2, a2, neg_inf)
        new = _safe_lse3(alpha, a1, a2) + lp_t
        active = (t < input_lengths)[:, None]
        return jnp.where(active, new, alpha), None

    alpha_T, _ = lax.scan(step, alpha0, (jnp.arange(1, T), lp[1:]))

    s_last = (2 * tl)[:, None]                                      # (B, 1)
    s_prev = jnp.maximum(s_last - 1, 0)
    a_last = jnp.take_along_axis(alpha_T, s_last, axis=1)[:, 0]
    a_prev = jnp.take_along_axis(alpha_T, s_prev, axis=1)[:, 0]
    a_prev = jnp.where(tl > 0, a_prev, neg_inf)

    m = jnp.maximum(a_last, a_prev)
    m_safe = jnp.where(jnp.isneginf(m), 0.0, m)
    log_lik = jnp.where(
        jnp.isneginf(m), -jnp.inf,
        m_safe + jnp.log(jnp.exp(a_last - m_safe) + jnp.exp(a_prev - m_safe)))
    loss_b = -log_lik
    loss_b = jnp.where(jnp.isfinite(loss_b), loss_b, 0.0)           # zero_infinity=True
    return jnp.sum(loss_b)


# ----------------------------------------------------------------------------
# Whole forward pass as one jitted region (projection kernel + scan fused).
# ----------------------------------------------------------------------------
@jax.jit
def _ctc_forward(w_p, b_p, hs_pad, hlens, ys_pad, ys_lens):
    B, T, D = hs_pad.shape
    Vp = w_p.shape[1]
    Lmax = ys_pad.shape[1]
    S = 2 * Lmax + 1
    S_pad = _round_up(S, 128)           # lane-dense output / DP width
    blank = 0

    # Extended label sequence: blank, y1, blank, y2, ..., yL, blank (blank-padded
    # to S_pad). Positions beyond 2*target_len are never read by the final lse,
    # so padding ids in ys_pad (e.g. -1) cannot corrupt the loss.
    ext = jnp.full((B, S_pad), blank, dtype=jnp.int32)
    ext = ext.at[:, 1:2 * Lmax:2].set(ys_pad.astype(jnp.int32))

    # Pre-gathered weight / bias slices at the extended labels (clamped so padding
    # ids can never index out of the padded-vocab range).
    ext_g = jnp.clip(ext, 0, Vp - 1)
    w_ext = jnp.transpose(jnp.take(w_p, ext_g, axis=1), (1, 0, 2))  # (B, D, S_pad) bf16
    b_ext = jnp.take(b_p[0], ext_g, axis=0)[:, None, :]             # (B, 1, S_pad) f32

    lp_ext = ctc_project_gather(hs_pad, w_p, b_p, w_ext, b_ext)     # (B, T, S_pad)
    lp_tbs = jnp.transpose(lp_ext, (1, 0, 2))                       # tiny (T, B, S_pad)

    loss = ctc_loss_sum_gathered(lp_tbs, ext, hlens, ys_lens, blank=blank)
    return loss / B                                                 # torch: / ys_hat.size(1)


# ----------------------------------------------------------------------------
# CTC module
# ----------------------------------------------------------------------------
class CTC:
    def __init__(self, odim, encoder_output_size, length_normalized_loss=False, key=None):
        if key is None:
            key = jax.random.PRNGKey(0)
        kw, kb = jax.random.split(key)
        eprojs = encoder_output_size
        # torch.nn.Linear stores (out, in); we store the transposed (in, out) for x @ W.
        w = jax.random.normal(kw, (eprojs, odim), jnp.float32) * 0.1
        b = jax.random.normal(kb, (1, odim), jnp.float32) * 0.1

        # 256-aligned vocab: matches v6e/v7x 256x256 MXU (and is a multiple of 128
        # for v5e).  Padded columns: zero weights + -1e30 bias (masked from softmax).
        # NOTE: projection runs in bf16 (f32 accumulate) -> small tolerance vs f32 torch.
        Vp = _round_up(odim, 256)
        self.w_p = (jnp.zeros((eprojs, Vp), jnp.float32)
                    .at[:, :odim].set(w)).astype(jnp.bfloat16)
        self.b_p = jnp.full((1, Vp), NEG, jnp.float32).at[:, :odim].set(b)

        self.odim = odim
        self.eprojs = eprojs
        self.length_normalized_loss = length_normalized_loss

    def forward(self, hs_pad, hlens, ys_pad, ys_lens):
        if self.length_normalized_loss:
            # TODO(synk): reduction='mean' (per-sample / target_length) not implemented.
            raise NotImplementedError
        return _ctc_forward(self.w_p, self.b_p, hs_pad, hlens, ys_pad, ys_lens)


if __name__ == "__main__":
    key = jax.random.PRNGKey(0)
    k_param, k_h, k_y = jax.random.split(key, 3)

    B, Tmax, D, odim, Lmax = 2, 8, 32, 16, 4

    ctc = CTC(odim=odim, encoder_output_size=D, key=k_param)

    hs_pad = jax.random.normal(k_h, (B, Tmax, D), jnp.float32)
    hlens = jnp.array([8, 6], dtype=jnp.int32)
    ys_pad = jax.random.randint(k_y, (B, Lmax), 1, odim, dtype=jnp.int32)
    ys_lens = jnp.array([4, 3], dtype=jnp.int32)

    loss = ctc.forward(hs_pad, hlens, ys_pad, ys_lens)
    loss = jax.block_until_ready(loss)
    assert jnp.isfinite(loss), "CTC loss is not finite"
    print("KERNEL_OK")
</pallas_src>

<mosaic_0001>
module attributes {stable_mosaic.version = 11 : i64} {
  func.func @_ctc_fused_kernel(%arg0: i32, %arg1: i32, %arg2: i32, %arg3: memref<1x8x32xbf16, #tpu.memory_space<vmem>>, %arg4: memref<32x256xbf16, #tpu.memory_space<vmem>>, %arg5: memref<1x256xf32, #tpu.memory_space<vmem>>, %arg6: memref<1x32x128xbf16, #tpu.memory_space<vmem>>, %arg7: memref<1x1x128xf32, #tpu.memory_space<vmem>>, %arg8: memref<1x8x128xf32, #tpu.memory_space<vmem>>, %arg9: memref<8x1xf32, #tpu.memory_space<vmem>>, %arg10: memref<8x1xf32, #tpu.memory_space<vmem>>) attributes {dimension_semantics = [#tpu.dimension_semantics<parallel>, #tpu.dimension_semantics<parallel>, #tpu.dimension_semantics<arbitrary>], iteration_bounds = array<i64: 2, 1, 1>, scalar_prefetch = 0 : i64, scratch_operands = 2 : i64, tpu.core_type = #tpu.core_type<tc>, window_params = [{transform_indices = @transform_0, window_bounds = array<i64: 1, 8, 32>}, {transform_indices = @transform_1, window_bounds = array<i64: 32, 256>}, {transform_indices = @transform_2, window_bounds = array<i64: 1, 256>}, {transform_indices = @transform_3, window_bounds = array<i64: 1, 32, 128>}, {transform_indices = @transform_4, window_bounds = array<i64: 1, 1, 128>}, {transform_indices = @transform_5, window_bounds = array<i64: 1, 8, 128>}]} {
    %c0_i32 = arith.constant 0 : i32
    %0 = arith.cmpi eq, %arg2, %c0_i32 : i32
    %1 = arith.extui %0 : i1 to i32
    %c0_i32_0 = arith.constant 0 : i32
    %2 = arith.cmpi ne, %1, %c0_i32_0 : i32
    scf.if %2 {
      %cst_21 = arith.constant -1.000000e+30 : f32
      %30 = vector.broadcast %cst_21 : f32 to vector<8x1xf32>
      %c0_22 = arith.constant 0 : index
      %c0_23 = arith.constant 0 : index
      %31 = vector.load %arg9[%c0_22, %c0_23] : memref<8x1xf32, #tpu.memory_space<vmem>>, vector<8x1xf32>
      tpu.vector_store %arg9[%c0_22, %c0_23], %30 {strides = array<i32>} : memref<8x1xf32, #tpu.memory_space<vmem>>, vector<8x1xf32>,
      %cst_24 = arith.constant 0.000000e+00 : f32
      %32 = vector.broadcast %cst_24 : f32 to vector<8x1xf32>
      %c0_25 = arith.constant 0 : index
      %c0_26 = arith.constant 0 : index
      %33 = vector.load %arg10[%c0_25, %c0_26] : memref<8x1xf32, #tpu.memory_space<vmem>>, vector<8x1xf32>
      tpu.vector_store %arg10[%c0_25, %c0_26], %32 {strides = array<i32>} : memref<8x1xf32, #tpu.memory_space<vmem>>, vector<8x1xf32>,
    } else {
    }
    %c0 = arith.constant 0 : index
    %c0_1 = arith.constant 0 : index
    %c0_2 = arith.constant 0 : index
    %3 = vector.load %arg3[%c0, %c0_1, %c0_2] : memref<1x8x32xbf16, #tpu.memory_space<vmem>>, vector<1x8x32xbf16>
    %4 = vector.shape_cast %3 : vector<1x8x32xbf16> to vector<8x32xbf16>
    %c0_3 = arith.constant 0 : index
    %c0_4 = arith.constant 0 : index
    %5 = vector.load %arg4[%c0_3, %c0_4] : memref<32x256xbf16, #tpu.memory_space<vmem>>, vector<32x256xbf16>
    %cst = arith.constant dense<0.000000e+00> : vector<8x256xf32>
    %6 = tpu.matmul %4, %5, %cst {dimension_numbers = #tpu.dot_dimension_numbers<[1], [0], [0], [1], [0, 0, 1, 1], [], []>} : vector<8x32xbf16>, vector<32x256xbf16>, vector<8x256xf32> -> vector<8x256xf32>
    %c0_5 = arith.constant 0 : index
    %c0_6 = arith.constant 0 : index
    %7 = vector.load %arg5[%c0_5, %c0_6] : memref<1x256xf32, #tpu.memory_space<vmem>>, vector<1x256xf32>
    %8 = vector.broadcast %7 : vector<1x256xf32> to vector<8x256xf32>
    %9 = arith.addf %6, %8 : vector<8x256xf32>
    %cst_7 = arith.constant dense<0xFF800000> : vector<8xf32>
    %10 = vector.multi_reduction <maximumf>, %9, %cst_7 [1] : vector<8x256xf32> to vector<8xf32>
    %11 = vector.shape_cast %10 : vector<8xf32> to vector<8x1xf32>
    %c0_8 = arith.constant 0 : index
    %c0_9 = arith.constant 0 : index
    %12 = vector.load %arg9[%c0_8, %c0_9] : memref<8x1xf32, #tpu.memory_space<vmem>>, vector<8x1xf32>
    %13 = arith.maximumf %12, %11 : vector<8x1xf32>
    %c0_10 = arith.constant 0 : index
    %c0_11 = arith.constant 0 : index
    %14 = vector.load %arg9[%c0_10, %c0_11] : memref<8x1xf32, #tpu.memory_space<vmem>>, vector<8x1xf32>
    %15 = arith.subf %14, %13 : vector<8x1xf32>
    %16 = math.exp %15 : vector<8x1xf32>
    %c0_12 = arith.constant 0 : index
    %c0_13 = arith.constant 0 : index
    %17 = vector.load %arg10[%c0_12, %c0_13] : memref<8x1xf32, #tpu.memory_space<vmem>>, vector<8x1xf32>
    %18 = arith.mulf %16, %17 : vector<8x1xf32>
    %19 = vector.broadcast %13 : vector<8x1xf32> to vector<8x256xf32>
    %20 = arith.subf %9, %19 : vector<8x256xf32>
    %21 = math.exp %20 : vector<8x256xf32>
    %cst_14 = arith.constant dense<0.000000e+00> : vector<8xf32>
    %22 = vector.multi_reduction <add>, %21, %cst_14 [1] : vector<8x256xf32> to vector<8xf32>
    %23 = vector.shape_cast %22 : vector<8xf32> to vector<8x1xf32>
    %24 = arith.addf %18, %23 : vector<8x1xf32>
    %c0_15 = arith.constant 0 : index
    %c0_16 = arith.constant 0 : index
    %25 = vector.load %arg10[%c0_15, %c0_16] : memref<8x1xf32, #tpu.memory_space<vmem>>, vector<8x1xf32>
    tpu.vector_store %arg10[%c0_15, %c0_16], %24 {strides = array<i32>} : memref<8x1xf32, #tpu.memory_space<vmem>>, vector<8x1xf32>,
    %c0_17 = arith.constant 0 : index
    %c0_18 = arith.constant 0 : index
    %26 = vector.load %arg9[%c0_17, %c0_18] : memref<8x1xf32, #tpu.memory_space<vmem>>, vector<8x1xf32>
    tpu.vector_store %arg9[%c0_17, %c0_18], %13 {strides = array<i32>} : memref<8x1xf32, #tpu.memory_space<vmem>>, vector<8x1xf32>,
    %c0_i32_19 = arith.constant 0 : i32
    %27 = arith.cmpi eq, %arg2, %c0_i32_19 : i32
    %28 = arith.extui %27 : i1 to i32
    %c0_i32_20 = arith.constant 0 : i32
    %29 = arith.cmpi ne, %28, %c0_i32_20 : i32
    scf.if %29 {
      %c0_21 = arith.constant 0 : index
      %c0_22 = arith.constant 0 : index
      %c0_23 = arith.constant 0 : index
      %30 = vector.load %arg6[%c0_21, %c0_22, %c0_23] : memref<1x32x128xbf16, #tpu.memory_space<vmem>>, vector<1x32x128xbf16>
      %31 = vector.shape_cast %30 : vector<1x32x128xbf16> to vector<32x128xbf16>
      %cst_24 = arith.constant dense<0.000000e+00> : vector<8x128xf32>
      %32 = tpu.matmul %4, %31, %cst_24 {dimension_numbers = #tpu.dot_dimension_numbers<[1], [0], [0], [1], [0, 0, 1, 1], [], []>} : vector<8x32xbf16>, vector<32x128xbf16>, vector<8x128xf32> -> vector<8x128xf32>
      %c0_25 = arith.constant 0 : index
      %c0_26 = arith.constant 0 : index
      %c0_27 = arith.constant 0 : index
      %33 = vector.load %arg7[%c0_25, %c0_26, %c0_27] : memref<1x1x128xf32, #tpu.memory_space<vmem>>, vector<1x1x128xf32>
      %34 = vector.shape_cast %33 : vector<1x1x128xf32> to vector<1x128xf32>
      %35 = vector.broadcast %34 : vector<1x128xf32> to vector<8x128xf32>
      %36 = arith.addf %32, %35 : vector<8x128xf32>
      %c0_28 = arith.constant 0 : index
      %c0_29 = arith.constant 0 : index
      %37 = vector.load %arg9[%c0_28, %c0_29] : memref<8x1xf32, #tpu.memory_space<vmem>>, vector<8x1xf32>
      %c0_30 = arith.constant 0 : index
      %c0_31 = arith.constant 0 : index
      %38 = vector.load %arg10[%c0_30, %c0_31] : memref<8x1xf32, #tpu.memory_space<vmem>>, vector<8x1xf32>
      %39 = math.log %38 : vector<8x1xf32>
      %40 = arith.addf %37, %39 : vector<8x1xf32>
      %41 = vector.broadcast %40 : vector<8x1xf32> to vector<8x128xf32>
      %42 = arith.subf %36, %41 : vector<8x128xf32>
      %c0_32 = arith.constant 0 : index
      %c0_33 = arith.constant 0 : index
      %c0_34 = arith.constant 0 : index
      %43 = vector.load %arg8[%c0_32, %c0_33, %c0_34] : memref<1x8x128xf32, #tpu.memory_space<vmem>>, vector<1x8x128xf32>
      %44 = vector.shape_cast %43 : vector<1x8x128xf32> to vector<8x128xf32>
      %45 = vector.shape_cast %42 : vector<8x128xf32> to vector<1x8x128xf32>
      tpu.vector_store %arg8[%c0_32, %c0_33, %c0_34], %45 {strides = array<i32>} : memref<1x8x128xf32, #tpu.memory_space<vmem>>, vector<1x8x128xf32>,
    } else {
    }
    return
  }
  func.func @transform_0(%arg0: i32, %arg1: i32, %arg2: i32) -> (i32, i32, i32) {
    %c0_i32 = arith.constant 0 : i32
    %c0_i32_0 = arith.constant 0 : i32
    return %arg0, %arg1, %c0_i32 : i32, i32, i32
  }
  func.func @transform_1(%arg0: i32, %arg1: i32, %arg2: i32) -> (i32, i32) {
    %c0_i32 = arith.constant 0 : i32
    %c0_i32_0 = arith.constant 0 : i32
    return %c0_i32, %arg2 : i32, i32
  }
  func.func @transform_2(%arg0: i32, %arg1: i32, %arg2: i32) -> (i32, i32) {
    %c0_i32 = arith.constant 0 : i32
    %c0_i32_0 = arith.constant 0 : i32
    return %c0_i32, %arg2 : i32, i32
  }
  func.func @transform_3(%arg0: i32, %arg1: i32, %arg2: i32) -> (i32, i32, i32) {
    %c0_i32 = arith.constant 0 : i32
    %c0_i32_0 = arith.constant 0 : i32
    %c0_i32_1 = arith.constant 0 : i32
    return %arg0, %c0_i32, %c0_i32_0 : i32, i32, i32
  }
  func.func @transform_4(%arg0: i32, %arg1: i32, %arg2: i32) -> (i32, i32, i32) {
    %c0_i32 = arith.constant 0 : i32
    %c0_i32_0 = arith.constant 0 : i32
    %c0_i32_1 = arith.constant 0 : i32
    return %arg0, %c0_i32, %c0_i32_0 : i32, i32, i32
  }
  func.func @transform_5(%arg0: i32, %arg1: i32, %arg2: i32) -> (i32, i32, i32) {
    %c0_i32 = arith.constant 0 : i32
    %c0_i32_0 = arith.constant 0 : i32
    return %arg0, %arg1, %c0_i32 : i32, i32, i32
  }
}

</mosaic_0001>

<llo_original>
// kernel: _ctc_forward.1
$region0: #{_ctc_forward.1}
  #allocation0 [shape = 'u32[]', space=smem, size = 0x4, offset = 0x4, fixed_abs, tag = 'smem constant byte address 0x4 - core index']
  #allocation1 [shape = 'u32[144,128]{1,0:T(1,128)}', space=vmem, size = 0x12000, scoped, tag = 'internal scratch']
  #allocation2 [shape = 'f32[8,1]{1,0:T(8,128)}', space=vmem, size = 0x1000, scoped, tag = 'scratch operand']
  #allocation3 [shape = 'f32[8,1]{1,0:T(8,128)}', space=vmem, size = 0x1000, scoped, tag = 'scratch operand']
  %s0 = inlined_call_operand.vmem [shape: bf16[2,8,32], index: 0, kind: input, shape index: {}]
  %s1 = inlined_call_operand.vmem [shape: bf16[32,256], index: 1, kind: input, shape index: {}]
  %s2 = inlined_call_operand.vmem [shape: f32[1,256], index: 2, kind: input, shape index: {}]
  %s3 = inlined_call_operand.vmem [shape: bf16[2,32,128], index: 3, kind: input, shape index: {}]
  %s4 = inlined_call_operand.vmem [shape: f32[2,1,128], index: 4, kind: input, shape index: {}]
  %s5 = inlined_call_operand.vmem [shape: f32[2,8,128], index: 5, kind: output, shape index: {}]
  %s6 = sld [smem:[#allocation0]]
  $region61: #{_ctc_forward.1} parent=0
    _
  %s8 = ssub.s32 1, %s6
  %s9 = scalar_select 0, %s8, %s6
  loop: start=0, step=1, limit=4
  $region2: #{_ctc_forward.1} parent=0 // loop_pre_header
    _
  $region3: #{_ctc_forward.1} parent=0 // loop_header
    %s11 = sphi 0, %s15
    %p12 = scmp.ge.s32.totalorder %s11, 4
    %s18 = sphi 0, %s37
    %s19 = sphi 0, %s33
    %s20 = sphi 0, %s29
    %s21 = sphi 0, %s18
    %s22 = sphi 0, %s19
    %s23 = sphi 0, %s20
    %s24 = sphi 0, %s21
    %s25 = sphi 0, %s22
    %s26 = sphi 0, %s23
    %s42 = sphi 0, %s44
    %s45 = sphi 0, %s42
    %s46 = sphi 0, %s45
    %s62 = sphi 0, %s46
    %s68 = sphi 0, %s70
    %s71 = sphi 0, %s68
    %s72 = sphi 0, %s71
    %s88 = sphi 0, %s72
    %s94 = sphi 0, %s96
    %s97 = sphi 0, %s94
    %s98 = sphi 0, %s97
    %s114 = sphi 0, %s98
    %s120 = sphi 0, %s122
    %s123 = sphi 0, %s120
    %s124 = sphi 0, %s123
    %s140 = sphi 0, %s124
    %s146 = sphi 0, %s148
    %s149 = sphi 0, %s146
    %s150 = sphi 0, %s149
    %s166 = sphi 0, %s150
    %s174 = sphi 0, %s176
    %s177 = sphi 0, %s174
    %s178 = sphi 0, %s177
    %s194 = sphi 0, %s178
  $region4: #{_ctc_forward.1} parent=0 // loop_header_branch
    %14 = sbr.rel (%p12) target = $region8
  $region5: #{_ctc_forward.1} parent=0 // loop_body
    %s16 = ssub.s32 %s11, 1
    %s17 = ssub.s32 %s11, 2
    %s27 = sadd.s32 1, %s20
    %p28 = scmp.ge.s32.totalorder %s27, 1
    %s29 = scalar_select %p28, 0, %s27
    %s30 = sadd.s32 1, %s19
    %s31 = scalar_select %p28, %s30, %s19
    %p32 = scmp.ge.s32.totalorder %s31, 1
    %s33 = scalar_select %p32, 0, %s31
    %s34 = sadd.s32 1, %s18
    %s35 = scalar_select %p32, %s34, %s18
    %p36 = scmp.ge.s32.totalorder %s35, 2
    %s37 = scalar_select %p36, 0, %s35
    %s38 = ssub.s32 %s18, %s37
    %s39 = ssub.s32 %s19, %s33
    %s40 = sor.u32 %s38, %s39
    %p41 = scmp.eq.s32.totalorder %s40, 0
    %s43 = sadd.s32 %s42, 1
    %s44 = scalar_select %p41, %s42, %s43
    %p47 = pneg %p41
    %p48 = scmp.eq.s32.totalorder %s11, 1
    %p49 = por %p47, %p48
    %p50 = scmp.ne.s32.totalorder %s42, %s45
    %p51 = scmp.eq.s32.totalorder %s11, 0
    %p52 = por %p50, %p51
    %p53 = scmp.ne.s32.totalorder %s42, %s45
    %p54 = scmp.eq.s32.totalorder %s16, 1
    %p55 = por %p53, %p54
    %p56 = scmp.ne.s32.totalorder %s45, %s46
    %p57 = scmp.eq.s32.totalorder %s16, 0
    %p58 = por %p56, %p57
    %p59 = scmp.ne.s32.totalorder %s45, %s46
    %p60 = scmp.eq.s32.totalorder %s17, 1
    %p61 = por %p59, %p60
    %p63 = scmp.ne.s32.totalorder %s46, %s62
    %p64 = scmp.eq.s32.totalorder %s17, 0
    %p65 = por %p63, %p64
    %s66 = ssub.s32 %s20, %s29
    %p67 = scmp.eq.s32.totalorder %s66, 0
    %s69 = sadd.s32 %s68, 1
    %s70 = scalar_select %p67, %s68, %s69
    %p73 = pneg %p67
    %p74 = scmp.eq.s32.totalorder %s11, 1
    %p75 = por %p73, %p74
    %p76 = scmp.ne.s32.totalorder %s68, %s71
    %p77 = scmp.eq.s32.totalorder %s11, 0
    %p78 = por %p76, %p77
    %p79 = scmp.ne.s32.totalorder %s68, %s71
    %p80 = scmp.eq.s32.totalorder %s16, 1
    %p81 = por %p79, %p80
    %p82 = scmp.ne.s32.totalorder %s71, %s72
    %p83 = scmp.eq.s32.totalorder %s16, 0
    %p84 = por %p82, %p83
    %p85 = scmp.ne.s32.totalorder %s71, %s72
    %p86 = scmp.eq.s32.totalorder %s17, 1
    %p87 = por %p85, %p86
    %p89 = scmp.ne.s32.totalorder %s72, %s88
    %p90 = scmp.eq.s32.totalorder %s17, 0
    %p91 = por %p89, %p90
    %s92 = ssub.s32 %s20, %s29
    %p93 = scmp.eq.s32.totalorder %s92, 0
    %s95 = sadd.s32 %s94, 1
    %s96 = scalar_select %p93, %s94, %s95
    %p99 = pneg %p93
    %p100 = scmp.eq.s32.totalorder %s11, 1
    %p101 = por %p99, %p100
    %p102 = scmp.ne.s32.totalorder %s94, %s97
    %p103 = scmp.eq.s32.totalorder %s11, 0
    %p104 = por %p102, %p103
    %p105 = scmp.ne.s32.totalorder %s94, %s97
    %p106 = scmp.eq.s32.totalorder %s16, 1
    %p107 = por %p105, %p106
    %p108 = scmp.ne.s32.totalorder %s97, %s98
    %p109 = scmp.eq.s32.totalorder %s16, 0
    %p110 = por %p108, %p109
    %p111 = scmp.ne.s32.totalorder %s97, %s98
    %p112 = scmp.eq.s32.totalorder %s17, 1
    %p113 = por %p111, %p112
    %p115 = scmp.ne.s32.totalorder %s98, %s114
    %p116 = scmp.eq.s32.totalorder %s17, 0
    %p117 = por %p115, %p116
    %s118 = ssub.s32 %s18, %s37
    %p119 = scmp.eq.s32.totalorder %s118, 0
    %s121 = sadd.s32 %s120, 1
    %s122 = scalar_select %p119, %s120, %s121
    %p125 = pneg %p119
    %p126 = scmp.eq.s32.totalorder %s11, 1
    %p127 = por %p125, %p126
    %p128 = scmp.ne.s32.totalorder %s120, %s123
    %p129 = scmp.eq.s32.totalorder %s11, 0
    %p130 = por %p128, %p129
    %p131 = scmp.ne.s32.totalorder %s120, %s123
    %p132 = scmp.eq.s32.totalorder %s16, 1
    %p133 = por %p131, %p132
    %p134 = scmp.ne.s32.totalorder %s123, %s124
    %p135 = scmp.eq.s32.totalorder %s16, 0
    %p136 = por %p134, %p135
    %p137 = scmp.ne.s32.totalorder %s123, %s124
    %p138 = scmp.eq.s32.totalorder %s17, 1
    %p139 = por %p137, %p138
    %p141 = scmp.ne.s32.totalorder %s124, %s140
    %p142 = scmp.eq.s32.totalorder %s17, 0
    %p143 = por %p141, %p142
    %s144 = ssub.s32 %s18, %s37
    %p145 = scmp.eq.s32.totalorder %s144, 0
    %s147 = sadd.s32 %s146, 1
    %s148 = scalar_select %p145, %s146, %s147
    %p151 = pneg %p145
    %p152 = scmp.eq.s32.totalorder %s11, 1
    %p153 = por %p151, %p152
    %p154 = scmp.ne.s32.totalorder %s146, %s149
    %p155 = scmp.eq.s32.totalorder %s11, 0
    %p156 = por %p154, %p155
    %p157 = scmp.ne.s32.totalorder %s146, %s149
    %p158 = scmp.eq.s32.totalorder %s16, 1
    %p159 = por %p157, %p158
    %p160 = scmp.ne.s32.totalorder %s149, %s150
    %p161 = scmp.eq.s32.totalorder %s16, 0
    %p162 = por %p160, %p161
    %p163 = scmp.ne.s32.totalorder %s149, %s150
    %p164 = scmp.eq.s32.totalorder %s17, 1
    %p165 = por %p163, %p164
    %p167 = scmp.ne.s32.totalorder %s150, %s166
    %p168 = scmp.eq.s32.totalorder %s17, 0
    %p169 = por %p167, %p168
    %s170 = ssub.s32 %s18, %s37
    %s171 = ssub.s32 %s19, %s33
    %s172 = sor.u32 %s170, %s171
    %p173 = scmp.eq.s32.totalorder %s172, 0
    %s175 = sadd.s32 %s174, 1
    %s176 = scalar_select %p173, %s174, %s175
    %p179 = pneg %p173
    %p180 = scmp.eq.s32.totalorder %s11, 1
    %p181 = por %p179, %p180
    %p182 = scmp.ne.s32.totalorder %s174, %s177
    %p183 = scmp.eq.s32.totalorder %s11, 0
    %p184 = por %p182, %p183
    %p185 = scmp.ne.s32.totalorder %s174, %s177
    %p186 = scmp.eq.s32.totalorder %s16, 1
    %p187 = por %p185, %p186
    %p188 = scmp.ne.s32.totalorder %s177, %s178
    %p189 = scmp.eq.s32.totalorder %s16, 0
    %p190 = por %p188, %p189
    %p191 = scmp.ne.s32.totalorder %s177, %s178
    %p192 = scmp.eq.s32.totalorder %s17, 1
    %p193 = por %p191, %p192
    %p195 = scmp.ne.s32.totalorder %s178, %s194
    %p196 = scmp.eq.s32.totalorder %s17, 0
    %p197 = por %p195, %p196
    %p198 = scmp.le.s32.totalorder 1, %s11
    %p199 = scmp.lt.s32.totalorder %s11, 3
    %p200 = pnand %p198, %p199
    %p201 = pneg %p200
    // Predicated region
    $region9: #{_ctc_forward.1} parent=5 // pred_check
      _
    $region10: #{_ctc_forward.1} parent=5 // pred_check_branch
      %203 = sbr.rel (%p200) target = $region12
    $region11: #{_ctc_forward.1} parent=5 // pred_region
      %s204 = ssub.s32 %s11, 1
      // Predicated region
      $region13: #{_ctc_forward.1} parent=11 // pred_check
        %p205 = pneg %p84
      $region14: #{_ctc_forward.1} parent=11 // pred_check_branch
        %207 = sbr.rel (%p205) target = $region16
      $region15: #{_ctc_forward.1} parent=11 // pred_region
        %s208 = smul.u32 2, %s23
        %p209 = scmp.lt.s32.totalorder %s208, 1
        %s210 = scalar_select %p209, %s208, 1
        %s211 = smul.addr %s210, 4
        %s212 = scalar_lea.vmem %s1, %s211
        %s213 = smul.u32 2, %s23
      $region16: #{_ctc_forward.1} parent=11 // pred_fallthru
        _
      // Predicated region
      $region17: #{_ctc_forward.1} parent=11 // pred_check
        %p214 = pneg %p110
      $region18: #{_ctc_forward.1} parent=11 // pred_check_branch
        %216 = sbr.rel (%p214) target = $region20
      $region19: #{_ctc_forward.1} parent=11 // pred_region
        %s217 = smul.u32 2, %s23
        %p218 = scmp.lt.s32.totalorder %s217, 1
        %s219 = scalar_select %p218, %s217, 1
        %s220 = scalar_lea.vmem %s2, %s219
        %s221 = smul.u32 2, %s23
      $region20: #{_ctc_forward.1} parent=11 // pred_fallthru
        _
    $region12: #{_ctc_forward.1} parent=5 // pred_fallthru
      _
    %p222 = scmp.lt.s32.totalorder %s11, 2
    // Predicated region
    $region21: #{_ctc_forward.1} parent=5 // pred_check
      %p223 = pneg %p222
    $region22: #{_ctc_forward.1} parent=5 // pred_check_branch
      %225 = sbr.rel (%p223) target = $region24
    $region23: #{_ctc_forward.1} parent=5 // pred_region
      // Predicated region
      $region25: #{_ctc_forward.1} parent=23 // pred_check
        %p226 = pneg %p52
      $region26: #{_ctc_forward.1} parent=23 // pred_check_branch
        %228 = sbr.rel (%p226) target = $region28
      $region27: #{_ctc_forward.1} parent=23 // pred_region
        %p229 = scmp.lt.s32.totalorder %s18, 1
        %s230 = scalar_select %p229, %s18, 1
        %p231 = scmp.lt.s32.totalorder %s19, 0
        %s232 = scalar_select %p231, %s19, 0
        %s233 = sadd.s32 %s232, %s230
        %s234 = smul.addr %s233, 4
        %s235 = scalar_lea.vmem %s0, %s234
      $region28: #{_ctc_forward.1} parent=23 // pred_fallthru
        _
      // Predicated region
      $region29: #{_ctc_forward.1} parent=23 // pred_check
        %p236 = pneg %p130
      $region30: #{_ctc_forward.1} parent=23 // pred_check_branch
        %238 = sbr.rel (%p236) target = $region32
      $region31: #{_ctc_forward.1} parent=23 // pred_region
        %p239 = scmp.lt.s32.totalorder %s18, 1
        %s240 = scalar_select %p239, %s18, 1
        %s241 = smul.addr %s240, 4
        %s242 = smul.addr %s241, 4
        %s243 = scalar_lea.vmem %s3, %s242
      $region32: #{_ctc_forward.1} parent=23 // pred_fallthru
        _
      // Predicated region
      $region33: #{_ctc_forward.1} parent=23 // pred_check
        %p244 = pneg %p156
      $region34: #{_ctc_forward.1} parent=23 // pred_check_branch
        %246 = sbr.rel (%p244) target = $region36
      $region35: #{_ctc_forward.1} parent=23 // pred_region
        %p247 = scmp.lt.s32.totalorder %s18, 1
        %s248 = scalar_select %p247, %s18, 1
        %s249 = scalar_lea.vmem %s4, %s248
      $region36: #{_ctc_forward.1} parent=23 // pred_fallthru
        _
    $region24: #{_ctc_forward.1} parent=5 // pred_fallthru
      _
    %p250 = scmp.le.s32.totalorder 1, %s11
    %p251 = scmp.lt.s32.totalorder %s11, 3
    %p252 = pnand %p250, %p251
    %p253 = pneg %p252
    // Predicated region
    $region37: #{_ctc_forward.1} parent=5 // pred_check
      _
    $region38: #{_ctc_forward.1} parent=5 // pred_check_branch
      %255 = sbr.rel (%p252) target = $region40
    $region39: #{_ctc_forward.1} parent=5 // pred_region
      %s256 = ssub.s32 %s11, 1
      %p257 = scmp.lt.s32.totalorder %s21, 1
      %s258 = scalar_select %p257, %s21, 1
      %p259 = scmp.lt.s32.totalorder %s22, 0
      %s260 = scalar_select %p259, %s22, 0
      %s261 = sadd.s32 %s260, %s258
      %s262 = smul.addr %s261, 4
      %s263 = scalar_lea.vmem %s0, %s262
      %p264 = pneg %p58
      %p265 = pneg %p55
      %s266 = smul.u32 2, %s23
      %p267 = scmp.lt.s32.totalorder %s266, 1
      %s268 = scalar_select %p267, %s266, 1
      %s269 = smul.addr %s268, 4
      %s270 = scalar_lea.vmem %s1, %s269
      %p271 = pneg %p84
      %p272 = pneg %p81
      %s273 = smul.u32 2, %s23
      %p274 = scmp.lt.s32.totalorder %s273, 1
      %s275 = scalar_select %p274, %s273, 1
      %s276 = scalar_lea.vmem %s2, %s275
      %p277 = pneg %p110
      %p278 = pneg %p107
      %p279 = scmp.lt.s32.totalorder %s21, 1
      %s280 = scalar_select %p279, %s21, 1
      %s281 = smul.addr %s280, 4
      %s282 = smul.addr %s281, 4
      %s283 = scalar_lea.vmem %s3, %s282
      %p284 = pneg %p136
      %p285 = pneg %p133
      %p286 = scmp.lt.s32.totalorder %s21, 1
      %s287 = scalar_select %p286, %s21, 1
      %s288 = scalar_lea.vmem %s4, %s287
      %p289 = pneg %p162
      %p290 = pneg %p159
      %p291 = pneg %p190
      %p292 = pneg %p187
      %p293 = scmp.lt.s32.totalorder %s21, 1
      %s294 = scalar_select %p293, %s21, 1
      %p295 = scmp.lt.s32.totalorder %s22, 0
      %s296 = scalar_select %p295, %s22, 0
      %s297 = sadd.s32 %s296, %s294
      %s298 = smul.addr %s297, 8
      %s299 = scalar_lea.vmem %s5, %s298
      %p300 = scmp.lt.s32.totalorder %s21, 1
      %s301 = scalar_select %p300, %s21, 1
      %p302 = scmp.lt.s32.totalorder %s22, 0
      %s303 = scalar_select %p302, %s22, 0
      %s304 = sadd.s32 %s303, %s301
      %s305 = smul.addr %s304, 4
      %s306 = scalar_lea.vmem %s0, %s305
      %s307 = smul.u32 2, %s23
      %p308 = scmp.lt.s32.totalorder %s307, 1
      %s309 = scalar_select %p308, %s307, 1
      %s310 = smul.addr %s309, 4
      %s311 = scalar_lea.vmem %s1, %s310
      %s312 = smul.u32 2, %s23
      %s313 = smul.u32 2, %s23
      %p314 = scmp.lt.s32.totalorder %s313, 1
      %s315 = scalar_select %p314, %s313, 1
      %s316 = scalar_lea.vmem %s2, %s315
      %s317 = smul.u32 2, %s23
      %p318 = scmp.lt.s32.totalorder %s21, 1
      %s319 = scalar_select %p318, %s21, 1
      %s320 = smul.addr %s319, 4
      %s321 = smul.addr %s320, 4
      %s322 = scalar_lea.vmem %s3, %s321
      %p323 = scmp.lt.s32.totalorder %s21, 1
      %s324 = scalar_select %p323, %s21, 1
      %s325 = scalar_lea.vmem %s4, %s324
      %p326 = scmp.lt.s32.totalorder %s21, 1
      %s327 = scalar_select %p326, %s21, 1
      %p328 = scmp.lt.s32.totalorder %s22, 0
      %s329 = scalar_select %p328, %s22, 0
      %s330 = sadd.s32 %s329, %s327
      %s331 = smul.addr %s330, 8
      %s332 = scalar_lea.vmem %s5, %s331
      %p334 = scmp.eq.s32.totalorder %s23, 0
      // Predicated region
      $region41: #{_ctc_forward.1} parent=39 // pred_check
        %p335 = pneg %p334
      $region42: #{_ctc_forward.1} parent=39 // pred_check_branch
        %337 = sbr.rel (%p335) target = $region44
      $region43: #{_ctc_forward.1} parent=39 // pred_region
        %vm338 = vcmask 7168
        %339 = vst.msk [vmem:[#allocation2] sm:$0xff] %vm338, -1e+30
        %340 = vst.msk [vmem:[#allocation3] sm:$0xff] %vm338, 0.0
      $region44: #{_ctc_forward.1} parent=39 // pred_fallthru
        _
      %v341 = vld [vmem:[%s306] sm:$0xf]
      %v342 = vld [vmem:[%s311] sm:$0xff]
      %v343 = vld [vmem:[%s311 + $0x8] sm:$0xff]
      %v344 = vld [vmem:[%s311 + $0x10] sm:$0xff]
      %v345 = vld [vmem:[%s311 + $0x18] sm:$0xff]
      %v346 = vld [vmem:[%s316] sm:$0x3]
      %v348 = vlaneseq
      %v349 = vshrl.u32 %v348, 7
      %v350 = vsub.s32 0, %v349
      %v351 = vrot.slane %v346, %v350
      %v352 = vlaneseq
      %v353 = vshrl.u32 %v352, 7
      %v354 = vsub.s32 1, %v353
      %v355 = vrot.slane %v346, %v354
      %v362 = vunpack.c.l.b16 %v342
      %v363 = vunpack.c.h.b16 %v342
      %v364 = vunpack.c.l.b16 %v343
      %v365 = vunpack.c.h.b16 %v343
      %v366 = vunpack.c.l.b16 %v344
      %v367 = vunpack.c.h.b16 %v344
      %v368 = vunpack.c.l.b16 %v345
      %v369 = vunpack.c.h.b16 %v345
      %v370 = vpack.c.b16 %v364, %v362
      %v371 = vpack.c.b16 %v365, %v363
      %v372 = vpack.c.b16 %v368, %v366
      %v373 = vpack.c.b16 %v369, %v367
      %vm378 = vcmask 261120
      %v380 = vsel %vm378, %v341, 0
      %382 = vmatprep.subr.bf16.mxu0 0
      %383 = vmatpush1.bf16.msra.mxu0 0
      %384 = vmatprep.subr.bf16.mxu0 0
      %385 = vmatpush1.bf16.msra.mxu0 0
      %386 = vmatprep.subr.bf16.mxu0 0
      %387 = vmatpush1.bf16.msra.mxu0 0
      %388 = vmatprep.subr.bf16.mxu0 0
      %389 = vmatpush1.bf16.msra.mxu0 0
      %390 = vmatprep.subr.bf16.mxu0 0
      %391 = vmatpush1.bf16.msra.mxu0 0
      %392 = vmatprep.subr.bf16.mxu0 0
      %393 = vmatpush1.bf16.msra.mxu0 0
      %394 = vmatprep.subr.bf16.mxu0 %v373
      %395 = vmatpush1.bf16.msra.mxu0 %v372
      %396 = vmatprep.subr.bf16.mxu0 %v371
      %397 = vmatpush1.bf16.msra.mxu0 %v370
      %398 = vmatprep.subr.bf16.mxu0 0
      %399 = vmatpush2.bf16.msra.mxu0 0
      %400 = vmatprep.subr.bf16.mxu0 0
      %401 = vmatpush2.bf16.msra.mxu0 0
      %402 = vmatprep.subr.bf16.mxu0 0
      %403 = vmatpush2.bf16.msra.mxu0 0
      %404 = vmatprep.subr.bf16.mxu0 0
      %405 = vmatpush2.bf16.msra.mxu0 0
      %406 = vmatprep.subr.bf16.mxu0 0
      %407 = vmatpush2.bf16.msra.mxu0 0
      %408 = vmatprep.subr.bf16.mxu0 0
      %409 = vmatpush2.bf16.msra.mxu0 0
      %410 = vmatprep.subr.bf16.mxu0 0
      %411 = vmatpush2.bf16.msra.mxu0 0
      %412 = vmatprep.subr.bf16.mxu0 0
      %413 = vmatpush2.bf16.msra.mxu0 0
      %414 = vmatprep.mubr.bf16.mxu0 0
      %415 = vmatmul.mubr.bf16.gmra.mxu0 %v380
      %v416 = vpop.f32.mrf.mxu0
      %v417 = vadd.f32 %v351, %v416
      %v418 = vpop.f32.mrf.mxu0
      %v419 = vadd.f32 %v355, %v418
      %v420 = vpop.f32.mrf.mxu0
      %v421 = vpop.f32.mrf.mxu0
      %422 = vdwg.mxu0
      %v423 = vmax.f32 %v417, %v419
      %424 = vmax.xlane.f32.xlu0 %v423
      %v425 = vpop.xlane.xlu0 %424
      %v426 = vld [vmem:[#allocation2] sm:$0xff]
      %v427 = vmax.f32 %v426, %v425
      %v428 = vsub.f32 %v426, %v427
      %v429 = vmul.f32 %v428, 1.442695
      %v430 = vpow.pop %v429
      %v431 = vld [vmem:[#allocation3] sm:$0xff]
      %v432 = vmul.f32 %v430, %v431
      %434 = vset.pattern.permute.xlu0 0
      %435 = vperm.xlu0 %434, %v427
      %v436 = vpop.permute.xlu0 %435
      %v438 = vsub.f32 %v417, %v436
      %v439 = vsub.f32 %v419, %v436
      %v440 = vmul.f32 %v438, 1.442695
      %v441 = vpow.pop %v440
      %v442 = vmul.f32 %v439, 1.442695
      %v443 = vpow.pop %v442
      %v444 = vadd.f32 %v441, %v443
      %445 = vadd.xlane.f32.xlu0 %v444
      %v446 = vpop.xlane.xlu0 %445
      %v447 = vadd.f32 %v432, %v446
      %vm448 = vcmask 7168
      %449 = vst.msk [vmem:[#allocation3] sm:$0xff] %vm448, %v447
      %450 = vst.msk [vmem:[#allocation2] sm:$0xff] %vm448, %v427
      // Predicated region
      $region45: #{_ctc_forward.1} parent=39 // pred_check
        %p451 = pneg %p334
      $region46: #{_ctc_forward.1} parent=39 // pred_check_branch
        %453 = sbr.rel (%p451) target = $region48
      $region47: #{_ctc_forward.1} parent=39 // pred_region
        %v454 = vld [vmem:[%s322] sm:$0xf]
        %v455 = vld [vmem:[%s322 + $0x4] sm:$0xf]
        %v456 = vld [vmem:[%s322 + $0x8] sm:$0xf]
        %v457 = vld [vmem:[%s322 + $0xc] sm:$0xf]
        %v458 = vld [vmem:[%s325] sm:$0x1]
        %v460 = vlaneseq
        %v461 = vshrl.u32 %v460, 7
        %v462 = vsub.s32 0, %v461
        %v463 = vrot.slane %v458, %v462
        %v469 = vunpack.c.l.b16 %v454
        %v470 = vunpack.c.l.b16 %v455
        %v471 = vunpack.c.l.b16 %v456
        %v472 = vunpack.c.l.b16 %v457
        %v473 = vpack.c.b16 %v470, %v469
        %v474 = vpack.c.b16 %v472, %v471
        %477 = vmatprep.subr.bf16.mxu0 0
        %478 = vmatpush1.bf16.msra.mxu0 0
        %479 = vmatprep.subr.bf16.mxu0 0
        %480 = vmatpush1.bf16.msra.mxu0 0
        %481 = vmatprep.subr.bf16.mxu0 0
        %482 = vmatpush1.bf16.msra.mxu0 0
        %483 = vmatprep.subr.bf16.mxu0 0
        %484 = vmatpush1.bf16.msra.mxu0 0
        %485 = vmatprep.subr.bf16.mxu0 0
        %486 = vmatpush1.bf16.msra.mxu0 0
        %487 = vmatprep.subr.bf16.mxu0 0
        %488 = vmatpush1.bf16.msra.mxu0 0
        %489 = vmatprep.subr.bf16.mxu0 0
        %490 = vmatpush1.bf16.msra.mxu0 %v474
        %491 = vmatprep.subr.bf16.mxu0 0
        %492 = vmatpush1.bf16.msra.mxu0 %v473
        %493 = vmatprep.subr.bf16.mxu0 0
        %494 = vmatpush2.bf16.msra.mxu0 0
        %495 = vmatprep.subr.bf16.mxu0 0
        %496 = vmatpush2.bf16.msra.mxu0 0
        %497 = vmatprep.subr.bf16.mxu0 0
        %498 = vmatpush2.bf16.msra.mxu0 0
        %499 = vmatprep.subr.bf16.mxu0 0
        %500 = vmatpush2.bf16.msra.mxu0 0
        %501 = vmatprep.subr.bf16.mxu0 0
        %502 = vmatpush2.bf16.msra.mxu0 0
        %503 = vmatprep.subr.bf16.mxu0 0
        %504 = vmatpush2.bf16.msra.mxu0 0
        %505 = vmatprep.subr.bf16.mxu0 0
        %506 = vmatpush2.bf16.msra.mxu0 0
        %507 = vmatprep.subr.bf16.mxu0 0
        %508 = vmatpush2.bf16.msra.mxu0 0
        %509 = vmatprep.mubr.bf16.mxu0 0
        %510 = vmatmul.mubr.bf16.gmra.mxu0 %v380
        %v511 = vpop.f32.mrf.mxu0
        %v512 = vadd.f32 %v463, %v511
        %v513 = vpop.f32.mrf.mxu0
        %v514 = vpop.f32.mrf.mxu0
        %v515 = vpop.f32.mrf.mxu0
        %516 = vdwg.mxu0
        %v517 = vld [vmem:[#allocation2] sm:$0xff]
        %v518 = vld [vmem:[#allocation3] sm:$0xff]
        %v519 = vlog2.pop %v518
        %v520 = vmul.f32 %v519, 0.6931472
        %v521 = vadd.f32 %v517, %v520
        %523 = vset.pattern.permute.xlu0 0
        %524 = vperm.xlu0 %523, %v521
        %v525 = vpop.permute.xlu0 %524
        %v527 = vsub.f32 %v512, %v525
        %528 = vst [vmem:[%s332] sm:$0xff] %v527
      $region48: #{_ctc_forward.1} parent=39 // pred_fallthru
        _
      %p529 = scmp.lt.s32.totalorder %s21, 1
      %s530 = scalar_select %p529, %s21, 1
      %p531 = scmp.lt.s32.totalorder %s22, 0
      %s532 = scalar_select %p531, %s22, 0
      %s533 = sadd.s32 %s532, %s530
      %s534 = smul.addr %s533, 8
      %s535 = scalar_lea.vmem %s5, %s534
      // Predicated region
      $region49: #{_ctc_forward.1} parent=39 // pred_check
        %p536 = pneg %p187
      $region50: #{_ctc_forward.1} parent=39 // pred_check_branch
        %538 = sbr.rel (%p536) target = $region52
      $region51: #{_ctc_forward.1} parent=39 // pred_region
        _
      $region52: #{_ctc_forward.1} parent=39 // pred_fallthru
        _
    $region40: #{_ctc_forward.1} parent=5 // pred_fallthru
      _
    %p539 = scmp.le.s32.totalorder 2, %s11
    // Predicated region
    $region53: #{_ctc_forward.1} parent=5 // pred_check
      %p540 = pneg %p539
    $region54: #{_ctc_forward.1} parent=5 // pred_check_branch
      %542 = sbr.rel (%p540) target = $region56
    $region55: #{_ctc_forward.1} parent=5 // pred_region
      %s543 = ssub.s32 %s11, 2
      // Predicated region
      $region57: #{_ctc_forward.1} parent=55 // pred_check
        %p544 = pneg %p193
      $region58: #{_ctc_forward.1} parent=55 // pred_check_branch
        %546 = sbr.rel (%p544) target = $region60
      $region59: #{_ctc_forward.1} parent=55 // pred_region
        %p547 = scmp.lt.s32.totalorder %s24, 1
        %s548 = scalar_select %p547, %s24, 1
        %p549 = scmp.lt.s32.totalorder %s25, 0
        %s550 = scalar_select %p549, %s25, 0
        %s551 = sadd.s32 %s550, %s548
        %s552 = smul.addr %s551, 8
        %s553 = scalar_lea.vmem %s5, %s552
      $region60: #{_ctc_forward.1} parent=55 // pred_fallthru
        _
    $region56: #{_ctc_forward.1} parent=5 // pred_fallthru
      _
  $region6: #{_ctc_forward.1} parent=0 // loop_footer
    %s15 = sadd.s32 1, %s11
  $region7: #{_ctc_forward.1} parent=0 // loop_footer_branch
    %10 = sbr.rel target = $region3
  $region8: #{_ctc_forward.1} parent=0 // loop_exit
    _

</llo_original>
